<compile_context>
chip_gen: v7x
topology: tpu7x:2x2x1
jax: 0.10.0
libtpu: 0.0.40
codegen_flags: <defaults>
</compile_context>

<pallas_src>
import jax
import jax.numpy as jnp
from jax.experimental import pallas as pl
from jax.experimental.pallas import tpu as pltpu

LANE = 128
BF16_SUBLANE = 16  # bf16 packs 16 rows per vreg sublane tile


def _round_up(x, n):
    return (x + n - 1) // n * n


def _sigmoid(x):
    # exp and approx reciprocal both issue on the EUP slot; no VALU divide.
    return pl.reciprocal(1.0 + jnp.exp(-x), approx=True)


def generator_kernel(xm_ref, w1_ref, wh_ref, b_ref, out_ref):
    """6-layer MLP on one (tm, *) batch tile.

    xm_ref : (tm, in_ch)   bf16   concat([x, m]) activations
    w1_ref : (in_ch, P)    bf16   encoder layer-1 weight
    wh_ref : (5, P, P)     bf16   [enc_L2, enc_L3, dec_L1, dec_L2, dec_L3]
    b_ref  : (6, 1, P)     f32    [b1..b6]
    out_ref: (tm, P)       bf16
    """
    f32 = jnp.float32
    bf16 = jnp.bfloat16

    def relu_bf16(h):
        # Cast first: halves vregs/VALU work for the max() on v6e/v7x.
        return jnp.maximum(h.astype(bf16), 0.0)

    # Encoder: Linear -> ReLU -> Linear -> ReLU -> Linear -> Sigmoid
    h = jnp.dot(xm_ref[...], w1_ref[...], preferred_element_type=f32) + b_ref[0]
    h = relu_bf16(h)
    h = jnp.dot(h, wh_ref[0], preferred_element_type=f32) + b_ref[1]
    h = relu_bf16(h)
    code = _sigmoid(
        jnp.dot(h, wh_ref[1], preferred_element_type=f32) + b_ref[2]).astype(bf16)

    # Decoder: Linear -> ReLU -> Linear -> ReLU -> Linear -> Sigmoid
    h = jnp.dot(code, wh_ref[2], preferred_element_type=f32) + b_ref[3]
    h = relu_bf16(h)
    h = jnp.dot(h, wh_ref[3], preferred_element_type=f32) + b_ref[4]
    h = relu_bf16(h)
    out_ref[...] = _sigmoid(
        jnp.dot(h, wh_ref[4], preferred_element_type=f32) + b_ref[5]
    ).astype(out_ref.dtype)


def init_generator_params(key, in_channels, hidden_channels, out_channels):
    """PyTorch nn.Linear-style init: W, b ~ U(-k, k), k = 1/sqrt(fan_in).
    Weights stored transposed to (in, out); biases stored as (1, out)."""
    dims = [
        (in_channels, hidden_channels),      # Encoder L1
        (hidden_channels, hidden_channels),  # Encoder L2
        (hidden_channels, hidden_channels),  # Encoder L3
        (hidden_channels, hidden_channels),  # Decoder L1
        (hidden_channels, hidden_channels),  # Decoder L2
        (hidden_channels, out_channels),     # Decoder L3
    ]
    params = []
    for fan_in, fan_out in dims:
        key, kw, kb = jax.random.split(key, 3)
        bound = 1.0 / float(fan_in) ** 0.5
        w = jax.random.uniform(kw, (fan_in, fan_out), jnp.float32, -bound, bound)
        b = jax.random.uniform(kb, (1, fan_out), jnp.float32, -bound, bound)
        params.append((w, b))
    # fc_m / fc_sigma: present in __init__, unused in forward(); init for parity.
    key, km_w, km_b, ks_w, ks_b = jax.random.split(key, 5)
    bound = 1.0 / float(hidden_channels) ** 0.5
    fc_m = (jax.random.uniform(km_w, (hidden_channels, hidden_channels), jnp.float32, -bound, bound),
            jax.random.uniform(km_b, (1, hidden_channels), jnp.float32, -bound, bound))
    fc_sigma = (jax.random.uniform(ks_w, (hidden_channels, hidden_channels), jnp.float32, -bound, bound),
                jax.random.uniform(ks_b, (1, hidden_channels), jnp.float32, -bound, bound))
    return params, (fc_m, fc_sigma)


def prepare_generator_weights(params):
    """One-time weight prep: zero-pad feature dims to 128 lanes, cast weights
    to bf16 (biases stay f32), pack the five (P,P) weights and six biases into
    single arrays so the kernel takes only 4 inputs.

    IMPORTANT: padding must stay ZERO. Sigmoid writes 0.5 into padded lanes of
    `code`/output, but zero weight ROWS in the next layer kill that
    contribution and the wrapper slices the padded output lanes off."""
    (w1, b1), (w2, b2), (w3, b3), (w4, b4), (w5, b5), (w6, b6) = params
    in_ch, hidden = w1.shape
    out_ch = w6.shape[1]
    P = _round_up(max(hidden, out_ch, LANE), LANE)

    def pad_w(w):
        r, c = w.shape
        return jnp.pad(w, ((0, P - r), (0, P - c))).astype(jnp.bfloat16)

    def pad_b(b):
        return jnp.pad(b, ((0, 0), (0, P - b.shape[1]))).astype(jnp.float32)

    w1_p = jnp.pad(w1, ((0, 0), (0, P - hidden))).astype(jnp.bfloat16)      # (in_ch, P)
    wh = jnp.stack([pad_w(w2), pad_w(w3), pad_w(w4), pad_w(w5), pad_w(w6)])  # (5, P, P)
    bs = jnp.stack([pad_b(b1), pad_b(b2), pad_b(b3),
                    pad_b(b4), pad_b(b5), pad_b(b6)])                        # (6, 1, P)
    return (w1_p, wh, bs), P, out_ch


def _pick_tile(batch):
    """Batch tile: multiple of 16 (bf16 sublane tile), aim for >=2 grid steps
    (megacore sharding on v7x), cap at 1024 rows (v5e vst/VMEM regime)."""
    b16 = _round_up(max(batch, BF16_SUBLANE), BF16_SUBLANE)
    tm = min(1024, _round_up(-(-b16 // 2), BF16_SUBLANE))
    tm = max(tm, BF16_SUBLANE)
    batch_p = _round_up(b16, tm)
    return tm, batch_p


def generator_forward(x, m, kweights, feat_pad, out_channels, *, trim_output=True):
    """x: (batch, dim_x), m: (batch, dim_m). Runs the 6-layer MLP in one
    batch-gridded Pallas kernel with weights resident in VMEM.

    If trim_output=False the padded (batch_p, feat_pad) bf16 result is
    returned as-is so a downstream matmul can consume it without an extra
    HBM->HBM slice copy."""
    w1_p, wh, bs = kweights
    batch, dim_x = x.shape
    _, dim_m = m.shape
    in_ch = dim_x + dim_m
    assert w1_p.shape[0] == in_ch, "layer-1 weight rows must match dim_x + dim_m"

    tm, batch_p = _pick_tile(batch)

    # Wrapper-side concat of two tiny arrays is effectively free; gives one
    # K=in_ch layer-1 dot in the kernel.
    xm = jnp.concatenate([x, m], axis=1).astype(jnp.bfloat16)
    if batch_p != batch:
        xm = jnp.pad(xm, ((0, batch_p - batch), (0, 0)))

    grid = (batch_p // tm,)

    in_specs = [
        pl.BlockSpec((tm, in_ch), lambda i: (i, 0)),          # activations stream
        pl.BlockSpec(w1_p.shape, lambda i: (0, 0)),           # VMEM-resident
        pl.BlockSpec(wh.shape, lambda i: (0, 0, 0)),          # VMEM-resident
        pl.BlockSpec(bs.shape, lambda i: (0, 0, 0)),          # VMEM-resident
    ]

    flops = 2 * batch_p * (in_ch * feat_pad + 5 * feat_pad * feat_pad)
    transcendentals = 4 * batch_p * feat_pad                  # 2 sigmoids (exp + rcp)
    bytes_accessed = (int(xm.size) * 2
                      + batch_p * feat_pad * 2
                      + int(w1_p.size) * 2 + int(wh.size) * 2 + int(bs.size) * 4)

    out_p = pl.pallas_call(
        generator_kernel,
        out_shape=jax.ShapeDtypeStruct((batch_p, feat_pad), jnp.bfloat16),
        grid=grid,
        in_specs=in_specs,
        out_specs=pl.BlockSpec((tm, feat_pad), lambda i: (i, 0)),
        compiler_params=pltpu.CompilerParams(
            dimension_semantics=("parallel",)),
        cost_estimate=pl.CostEstimate(flops=flops,
                                      transcendentals=transcendentals,
                                      bytes_accessed=bytes_accessed),
    )(xm, w1_p, wh, bs)

    if trim_output:
        # Drop batch padding and the lane padding on the output features.
        return out_p[:batch, :out_channels]
    return out_p


def generator_forward_ref(x, m, params):
    """Pure-JAX f32 reference with original (unpadded) semantics."""
    h = jnp.concatenate([x, m], axis=1)
    (w1, b1), (w2, b2), (w3, b3), (w4, b4), (w5, b5), (w6, b6) = params
    h = jax.nn.relu(h @ w1 + b1)
    h = jax.nn.relu(h @ w2 + b2)
    code = jax.nn.sigmoid(h @ w3 + b3)
    h = jax.nn.relu(code @ w4 + b4)
    h = jax.nn.relu(h @ w5 + b5)
    return jax.nn.sigmoid(h @ w6 + b6)


if __name__ == "__main__":
    # Small GAIN-like shapes: data dim 8, in_channels = 2*8 (x concat mask).
    dim = 8
    in_channels = 2 * dim
    hidden_channels = 32
    out_channels = dim

    key = jax.random.PRNGKey(0)
    kx, km, kp = jax.random.split(key, 3)

    params, _unused = init_generator_params(kp, in_channels, hidden_channels, out_channels)
    kweights, feat_pad, out_ch = prepare_generator_weights(params)

    ok = True
    # batch=8 -> single grid step; batch=40 -> padded multi-step grid.
    for batch in (8, 40):
        kxb, kmb = jax.random.split(jax.random.fold_in(kx, batch))
        x = jax.random.uniform(kxb, (batch, dim), jnp.float32)
        m = (jax.random.uniform(kmb, (batch, dim)) > 0.3).astype(jnp.float32)

        out = generator_forward(x, m, kweights, feat_pad, out_ch)
        out = jax.block_until_ready(out)
        assert out.shape == (batch, out_channels)

        ref = generator_forward_ref(x, m, params)
        # bf16 weights/activations/output + approx-reciprocal sigmoid -> relaxed
        # tolerance vs f32 reference.
        ok = ok and bool(jnp.allclose(out.astype(jnp.float32), ref, atol=3e-2, rtol=3e-2))

    assert ok, "mismatch vs JAX reference"
    print("KERNEL_OK")
</pallas_src>

<mosaic_0001>
module attributes {stable_mosaic.version = 11 : i64} {
  func.func @generator_kernel(%arg0: i32, %arg1: memref<16x16xbf16, #tpu.memory_space<vmem>>, %arg2: memref<16x128xbf16, #tpu.memory_space<vmem>>, %arg3: memref<5x128x128xbf16, #tpu.memory_space<vmem>>, %arg4: memref<6x1x128xf32, #tpu.memory_space<vmem>>, %arg5: memref<16x128xbf16, #tpu.memory_space<vmem>>) attributes {dimension_semantics = [#tpu.dimension_semantics<parallel>], iteration_bounds = array<i64: 1>, scalar_prefetch = 0 : i64, scratch_operands = 0 : i64, tpu.core_type = #tpu.core_type<tc>, window_params = [{transform_indices = @transform_0, window_bounds = array<i64: 16, 16>}, {pipeline_mode = #tpu.pipeline_mode<synchronous>, transform_indices = @transform_1, window_bounds = array<i64: 16, 128>}, {pipeline_mode = #tpu.pipeline_mode<synchronous>, transform_indices = @transform_2, window_bounds = array<i64: 5, 128, 128>}, {pipeline_mode = #tpu.pipeline_mode<synchronous>, transform_indices = @transform_3, window_bounds = array<i64: 6, 1, 128>}, {transform_indices = @transform_4, window_bounds = array<i64: 16, 128>}]} {
    %c0 = arith.constant 0 : index
    %c0_0 = arith.constant 0 : index
    %0 = vector.load %arg1[%c0, %c0_0] : memref<16x16xbf16, #tpu.memory_space<vmem>>, vector<16x16xbf16>
    %c0_1 = arith.constant 0 : index
    %c0_2 = arith.constant 0 : index
    %1 = vector.load %arg2[%c0_1, %c0_2] : memref<16x128xbf16, #tpu.memory_space<vmem>>, vector<16x128xbf16>
    %cst = arith.constant dense<0.000000e+00> : vector<16x128xf32>
    %2 = tpu.matmul %0, %1, %cst {dimension_numbers = #tpu.dot_dimension_numbers<[1], [0], [0], [1], [0, 0, 1, 1], [], []>} : vector<16x16xbf16>, vector<16x128xbf16>, vector<16x128xf32> -> vector<16x128xf32>
    %c0_3 = arith.constant 0 : index
    %c0_4 = arith.constant 0 : index
    %c0_5 = arith.constant 0 : index
    %3 = vector.load %arg4[%c0_3, %c0_4, %c0_5] : memref<6x1x128xf32, #tpu.memory_space<vmem>>, vector<1x1x128xf32>
    %4 = vector.shape_cast %3 : vector<1x1x128xf32> to vector<1x128xf32>
    %5 = vector.broadcast %4 : vector<1x128xf32> to vector<16x128xf32>
    %6 = arith.addf %2, %5 : vector<16x128xf32>
    %7 = arith.truncf %6 : vector<16x128xf32> to vector<16x128xbf16>
    %cst_6 = arith.constant 0.000000e+00 : bf16
    %8 = vector.broadcast %cst_6 : bf16 to vector<16x128xbf16>
    %9 = arith.maximumf %7, %8 : vector<16x128xbf16>
    %c0_7 = arith.constant 0 : index
    %c0_8 = arith.constant 0 : index
    %c0_9 = arith.constant 0 : index
    %10 = vector.load %arg3[%c0_7, %c0_8, %c0_9] : memref<5x128x128xbf16, #tpu.memory_space<vmem>>, vector<1x128x128xbf16>
    %11 = vector.shape_cast %10 : vector<1x128x128xbf16> to vector<128x128xbf16>
    %cst_10 = arith.constant dense<0.000000e+00> : vector<16x128xf32>
    %12 = tpu.matmul %9, %11, %cst_10 {dimension_numbers = #tpu.dot_dimension_numbers<[1], [0], [0], [1], [0, 0, 1, 1], [], []>} : vector<16x128xbf16>, vector<128x128xbf16>, vector<16x128xf32> -> vector<16x128xf32>
    %c1 = arith.constant 1 : index
    %c0_11 = arith.constant 0 : index
    %c0_12 = arith.constant 0 : index
    %13 = vector.load %arg4[%c1, %c0_11, %c0_12] : memref<6x1x128xf32, #tpu.memory_space<vmem>>, vector<1x1x128xf32>
    %14 = vector.shape_cast %13 : vector<1x1x128xf32> to vector<1x128xf32>
    %15 = vector.broadcast %14 : vector<1x128xf32> to vector<16x128xf32>
    %16 = arith.addf %12, %15 : vector<16x128xf32>
    %17 = arith.truncf %16 : vector<16x128xf32> to vector<16x128xbf16>
    %cst_13 = arith.constant 0.000000e+00 : bf16
    %18 = vector.broadcast %cst_13 : bf16 to vector<16x128xbf16>
    %19 = arith.maximumf %17, %18 : vector<16x128xbf16>
    %c1_14 = arith.constant 1 : index
    %c0_15 = arith.constant 0 : index
    %c0_16 = arith.constant 0 : index
    %20 = vector.load %arg3[%c1_14, %c0_15, %c0_16] : memref<5x128x128xbf16, #tpu.memory_space<vmem>>, vector<1x128x128xbf16>
    %21 = vector.shape_cast %20 : vector<1x128x128xbf16> to vector<128x128xbf16>
    %cst_17 = arith.constant dense<0.000000e+00> : vector<16x128xf32>
    %22 = tpu.matmul %19, %21, %cst_17 {dimension_numbers = #tpu.dot_dimension_numbers<[1], [0], [0], [1], [0, 0, 1, 1], [], []>} : vector<16x128xbf16>, vector<128x128xbf16>, vector<16x128xf32> -> vector<16x128xf32>
    %c2 = arith.constant 2 : index
    %c0_18 = arith.constant 0 : index
    %c0_19 = arith.constant 0 : index
    %23 = vector.load %arg4[%c2, %c0_18, %c0_19] : memref<6x1x128xf32, #tpu.memory_space<vmem>>, vector<1x1x128xf32>
    %24 = vector.shape_cast %23 : vector<1x1x128xf32> to vector<1x128xf32>
    %25 = vector.broadcast %24 : vector<1x128xf32> to vector<16x128xf32>
    %26 = arith.addf %22, %25 : vector<16x128xf32>
    %cst_20 = arith.constant 0.000000e+00 : f32
    %27 = vector.broadcast %cst_20 : f32 to vector<16x128xf32>
    %28 = arith.subf %27, %26 : vector<16x128xf32>
    %29 = math.exp %28 : vector<16x128xf32>
    %cst_21 = arith.constant 1.000000e+00 : f32
    %30 = vector.broadcast %cst_21 : f32 to vector<16x128xf32>
    %31 = arith.addf %30, %29 : vector<16x128xf32>
    %32 = tpu.reciprocal %31 {approx = true} : vector<16x128xf32> -> vector<16x128xf32>
    %33 = arith.truncf %32 : vector<16x128xf32> to vector<16x128xbf16>
    %c2_22 = arith.constant 2 : index
    %c0_23 = arith.constant 0 : index
    %c0_24 = arith.constant 0 : index
    %34 = vector.load %arg3[%c2_22, %c0_23, %c0_24] : memref<5x128x128xbf16, #tpu.memory_space<vmem>>, vector<1x128x128xbf16>
    %35 = vector.shape_cast %34 : vector<1x128x128xbf16> to vector<128x128xbf16>
    %cst_25 = arith.constant dense<0.000000e+00> : vector<16x128xf32>
    %36 = tpu.matmul %33, %35, %cst_25 {dimension_numbers = #tpu.dot_dimension_numbers<[1], [0], [0], [1], [0, 0, 1, 1], [], []>} : vector<16x128xbf16>, vector<128x128xbf16>, vector<16x128xf32> -> vector<16x128xf32>
    %c3 = arith.constant 3 : index
    %c0_26 = arith.constant 0 : index
    %c0_27 = arith.constant 0 : index
    %37 = vector.load %arg4[%c3, %c0_26, %c0_27] : memref<6x1x128xf32, #tpu.memory_space<vmem>>, vector<1x1x128xf32>
    %38 = vector.shape_cast %37 : vector<1x1x128xf32> to vector<1x128xf32>
    %39 = vector.broadcast %38 : vector<1x128xf32> to vector<16x128xf32>
    %40 = arith.addf %36, %39 : vector<16x128xf32>
    %41 = arith.truncf %40 : vector<16x128xf32> to vector<16x128xbf16>
    %cst_28 = arith.constant 0.000000e+00 : bf16
    %42 = vector.broadcast %cst_28 : bf16 to vector<16x128xbf16>
    %43 = arith.maximumf %41, %42 : vector<16x128xbf16>
    %c3_29 = arith.constant 3 : index
    %c0_30 = arith.constant 0 : index
    %c0_31 = arith.constant 0 : index
    %44 = vector.load %arg3[%c3_29, %c0_30, %c0_31] : memref<5x128x128xbf16, #tpu.memory_space<vmem>>, vector<1x128x128xbf16>
    %45 = vector.shape_cast %44 : vector<1x128x128xbf16> to vector<128x128xbf16>
    %cst_32 = arith.constant dense<0.000000e+00> : vector<16x128xf32>
    %46 = tpu.matmul %43, %45, %cst_32 {dimension_numbers = #tpu.dot_dimension_numbers<[1], [0], [0], [1], [0, 0, 1, 1], [], []>} : vector<16x128xbf16>, vector<128x128xbf16>, vector<16x128xf32> -> vector<16x128xf32>
    %c4 = arith.constant 4 : index
    %c0_33 = arith.constant 0 : index
    %c0_34 = arith.constant 0 : index
    %47 = vector.load %arg4[%c4, %c0_33, %c0_34] : memref<6x1x128xf32, #tpu.memory_space<vmem>>, vector<1x1x128xf32>
    %48 = vector.shape_cast %47 : vector<1x1x128xf32> to vector<1x128xf32>
    %49 = vector.broadcast %48 : vector<1x128xf32> to vector<16x128xf32>
    %50 = arith.addf %46, %49 : vector<16x128xf32>
    %51 = arith.truncf %50 : vector<16x128xf32> to vector<16x128xbf16>
    %cst_35 = arith.constant 0.000000e+00 : bf16
    %52 = vector.broadcast %cst_35 : bf16 to vector<16x128xbf16>
    %53 = arith.maximumf %51, %52 : vector<16x128xbf16>
    %c4_36 = arith.constant 4 : index
    %c0_37 = arith.constant 0 : index
    %c0_38 = arith.constant 0 : index
    %54 = vector.load %arg3[%c4_36, %c0_37, %c0_38] : memref<5x128x128xbf16, #tpu.memory_space<vmem>>, vector<1x128x128xbf16>
    %55 = vector.shape_cast %54 : vector<1x128x128xbf16> to vector<128x128xbf16>
    %cst_39 = arith.constant dense<0.000000e+00> : vector<16x128xf32>
    %56 = tpu.matmul %53, %55, %cst_39 {dimension_numbers = #tpu.dot_dimension_numbers<[1], [0], [0], [1], [0, 0, 1, 1], [], []>} : vector<16x128xbf16>, vector<128x128xbf16>, vector<16x128xf32> -> vector<16x128xf32>
    %c5 = arith.constant 5 : index
    %c0_40 = arith.constant 0 : index
    %c0_41 = arith.constant 0 : index
    %57 = vector.load %arg4[%c5, %c0_40, %c0_41] : memref<6x1x128xf32, #tpu.memory_space<vmem>>, vector<1x1x128xf32>
    %58 = vector.shape_cast %57 : vector<1x1x128xf32> to vector<1x128xf32>
    %59 = vector.broadcast %58 : vector<1x128xf32> to vector<16x128xf32>
    %60 = arith.addf %56, %59 : vector<16x128xf32>
    %cst_42 = arith.constant 0.000000e+00 : f32
    %61 = vector.broadcast %cst_42 : f32 to vector<16x128xf32>
    %62 = arith.subf %61, %60 : vector<16x128xf32>
    %63 = math.exp %62 : vector<16x128xf32>
    %cst_43 = arith.constant 1.000000e+00 : f32
    %64 = vector.broadcast %cst_43 : f32 to vector<16x128xf32>
    %65 = arith.addf %64, %63 : vector<16x128xf32>
    %66 = tpu.reciprocal %65 {approx = true} : vector<16x128xf32> -> vector<16x128xf32>
    %67 = arith.truncf %66 : vector<16x128xf32> to vector<16x128xbf16>
    %c0_44 = arith.constant 0 : index
    %c0_45 = arith.constant 0 : index
    %68 = vector.load %arg5[%c0_44, %c0_45] : memref<16x128xbf16, #tpu.memory_space<vmem>>, vector<16x128xbf16>
    tpu.vector_store %arg5[%c0_44, %c0_45], %67 {strides = array<i32>} : memref<16x128xbf16, #tpu.memory_space<vmem>>, vector<16x128xbf16>,
    return
  }
  func.func @transform_0(%arg0: i32) -> (i32, i32) {
    %c0_i32 = arith.constant 0 : i32
    %c0_i32_0 = arith.constant 0 : i32
    return %arg0, %c0_i32 : i32, i32
  }
  func.func @transform_1(%arg0: i32) -> (i32, i32) {
    %c0_i32 = arith.constant 0 : i32
    %c0_i32_0 = arith.constant 0 : i32
    %c0_i32_1 = arith.constant 0 : i32
    return %c0_i32, %c0_i32_0 : i32, i32
  }
  func.func @transform_2(%arg0: i32) -> (i32, i32, i32) {
    %c0_i32 = arith.constant 0 : i32
    %c0_i32_0 = arith.constant 0 : i32
    %c0_i32_1 = arith.constant 0 : i32
    %c0_i32_2 = arith.constant 0 : i32
    return %c0_i32, %c0_i32_0, %c0_i32_1 : i32, i32, i32
  }
  func.func @transform_3(%arg0: i32) -> (i32, i32, i32) {
    %c0_i32 = arith.constant 0 : i32
    %c0_i32_0 = arith.constant 0 : i32
    %c0_i32_1 = arith.constant 0 : i32
    %c0_i32_2 = arith.constant 0 : i32
    return %c0_i32, %c0_i32_0, %c0_i32_1 : i32, i32, i32
  }
  func.func @transform_4(%arg0: i32) -> (i32, i32) {
    %c0_i32 = arith.constant 0 : i32
    %c0_i32_0 = arith.constant 0 : i32
    return %arg0, %c0_i32 : i32, i32
  }
}

</mosaic_0001>

<llo_original>
// kernel: tpu_custom_call.1
$region0: #{tpu_custom_call.1}
  #allocation0 [shape = 'u32[]', space=smem, size = 0x4, offset = 0x4, fixed_abs, tag = 'smem constant byte address 0x4 - core index']
  #allocation1 [shape = 'u32[144,128]{1,0:T(1,128)}', space=vmem, size = 0x12000, scoped, tag = 'internal scratch']
  %s0 = inlined_call_operand.hbm [shape: bf16[16,16], index: 0, kind: input, shape index: {}]
  %s1 = inlined_call_operand.hbm [shape: bf16[16,128], index: 1, kind: input, shape index: {}]
  %s2 = inlined_call_operand.hbm [shape: bf16[5,128,128], index: 2, kind: input, shape index: {}]
  %s3 = inlined_call_operand.vmem [shape: f32[6,1,128], index: 3, kind: input, shape index: {}]
  %s4 = inlined_call_operand.hbm [shape: bf16[16,128], index: 4, kind: output, shape index: {}]
  %s5 = sld [smem:[#allocation0]]
  $region38: #{tpu_custom_call.1} parent=0
    _
  %s7 = ssub.s32 1, %s5
  %s8 = scalar_select 0, %s7, %s5
  $region1: #{tpu_custom_call.1} parent=0
    #allocation2 [shape = 'u8[4096]{0}', space=vmem, size = 0x1000, scoped, tag = 'input window, operand 0, single buffered']
    #allocation3 [shape = 's32[1]{0}', space=sflag, size = 0x4, scoped, tag = 'scoped memory for tpu_custom_call.1']
    #allocation4 [shape = 's32[1]{0}', space=sflag, size = 0x4, scoped, tag = 'scoped memory for tpu_custom_call.1']
    #allocation5 [shape = 'u8[4096]{0}', space=vmem, size = 0x1000, scoped, tag = 'input window, operand 1, single buffered']
    #allocation6 [shape = 's32[1]{0}', space=sflag, size = 0x4, scoped, tag = 'scoped memory for tpu_custom_call.1']
    #allocation7 [shape = 'u8[163840]{0}', space=vmem, size = 0x28000, scoped, tag = 'input window, operand 2, single buffered']
    #allocation8 [shape = 'u8[4096]{0}', space=vmem, size = 0x1000, scoped, tag = 'output window, operand 0, single buffered']
    %9 = vsyncpa [#allocation3], 0
    %10 = vsyncpa [#allocation6], 0
    %11 = vsyncpa [#allocation4], 0
    // Predicated region
    $region2: #{tpu_custom_call.1} parent=1 // pred_check
      _
    $region3: #{tpu_custom_call.1} parent=1 // pred_check_branch
      %13 = sbr.rel (0) target = $region5
    $region4: #{tpu_custom_call.1} parent=1 // pred_region
      %s15 = ssub.s32 128, 128
      %16 = vsyncadd [#allocation3], %s15
      %s17 = sshll.u32 [#allocation2], 4
      %s18 = int_to_ptr.vmem [resolvable:$true] %s17
      %23 = dma.hbm_to_vmem [thread:$0]  %s0, 128, %s18, [#allocation3], 64, 64, 4
    $region5: #{tpu_custom_call.1} parent=1 // pred_fallthru
      _
    // Predicated region
    $region6: #{tpu_custom_call.1} parent=1 // pred_check
      _
    $region7: #{tpu_custom_call.1} parent=1 // pred_check_branch
      %25 = sbr.rel (0) target = $region9
    $region8: #{tpu_custom_call.1} parent=1 // pred_region
      %s27 = ssub.s32 128, 128
      %28 = vsyncadd [#allocation6], %s27
      %s29 = sshll.u32 [#allocation5], 4
      %s30 = int_to_ptr.vmem [resolvable:$true] %s29
      %35 = dma.hbm_to_vmem [thread:$0]  %s1, 128, %s30, [#allocation6], 64, 64, 4
    $region9: #{tpu_custom_call.1} parent=1 // pred_fallthru
      _
    // Predicated region
    $region10: #{tpu_custom_call.1} parent=1 // pred_check
      _
    $region11: #{tpu_custom_call.1} parent=1 // pred_check_branch
      %37 = sbr.rel (0) target = $region13
    $region12: #{tpu_custom_call.1} parent=1 // pred_region
      %s39 = ssub.s32 5120, 5120
      %40 = vsyncadd [#allocation6], %s39
      %s41 = sshll.u32 [#allocation7], 4
      %s42 = int_to_ptr.vmem [resolvable:$true] %s41
      %47 = dma.hbm_to_vmem [thread:$0]  %s2, 5120, %s42, [#allocation6], 64, 64, 4
    $region13: #{tpu_custom_call.1} parent=1 // pred_fallthru
      _
    // Predicated region
    $region14: #{tpu_custom_call.1} parent=1 // pred_check
      _
    $region15: #{tpu_custom_call.1} parent=1 // pred_check_branch
      %49 = sbr.rel (0) target = $region17
    $region16: #{tpu_custom_call.1} parent=1 // pred_region
      _
    $region17: #{tpu_custom_call.1} parent=1 // pred_fallthru
      _
    // Predicated region
    $region18: #{tpu_custom_call.1} parent=1 // pred_check
      _
    $region19: #{tpu_custom_call.1} parent=1 // pred_check_branch
      %51 = sbr.rel (0) target = $region21
    $region20: #{tpu_custom_call.1} parent=1 // pred_region
      %52 = dma.done [#allocation3], 128
    $region21: #{tpu_custom_call.1} parent=1 // pred_fallthru
      _
    // Predicated region
    $region22: #{tpu_custom_call.1} parent=1 // pred_check
      _
    $region23: #{tpu_custom_call.1} parent=1 // pred_check_branch
      %54 = sbr.rel (0) target = $region25
    $region24: #{tpu_custom_call.1} parent=1 // pred_region
      %55 = dma.done [#allocation6], 128
    $region25: #{tpu_custom_call.1} parent=1 // pred_fallthru
      _
    // Predicated region
    $region26: #{tpu_custom_call.1} parent=1 // pred_check
      _
    $region27: #{tpu_custom_call.1} parent=1 // pred_check_branch
      %57 = sbr.rel (0) target = $region29
    $region28: #{tpu_custom_call.1} parent=1 // pred_region
      %58 = dma.done [#allocation6], 5120
    $region29: #{tpu_custom_call.1} parent=1 // pred_fallthru
      _
    %v60 = vld [vmem:[#allocation2] sm:$0xf]
    %v61 = vld [vmem:[#allocation2 + $0x4] sm:$0xf]
    %v62 = vld [vmem:[#allocation5] sm:$0xf]
    %v63 = vld [vmem:[#allocation5 + $0x4] sm:$0xf]
    %v64 = vld [vmem:[%s3] sm:$0x1]
    %v66 = vlaneseq
    %v67 = vshrl.u32 %v66, 7
    %v68 = vsub.s32 0, %v67
    %v69 = vrot.slane %v64, %v68
    %v73 = vunpack.c.l.b16 %v60
    %v74 = vunpack.c.l.b16 %v61
    %v75 = vpack.c.b16 %v74, %v73
    %v78 = vunpack.c.l.b16 %v62
    %v79 = vunpack.c.l.b16 %v63
    %v80 = vpack.c.b16 %v79, %v78
    %vm82 = vcmask 130048
    %v84 = vsel %vm82, %v75, 0
    %86 = vmatprep.subr.bf16.mxu0 0
    %87 = vmatpush1.bf16.msra.mxu0 %v80
    %88 = vmatprep.subr.bf16.mxu0 0
    %89 = vmatpush1.bf16.msra.mxu0 0
    %90 = vmatprep.subr.bf16.mxu0 0
    %91 = vmatpush1.bf16.msra.mxu0 0
    %92 = vmatprep.subr.bf16.mxu0 0
    %93 = vmatpush1.bf16.msra.mxu0 0
    %94 = vmatprep.subr.bf16.mxu0 0
    %95 = vmatpush1.bf16.msra.mxu0 0
    %96 = vmatprep.subr.bf16.mxu0 0
    %97 = vmatpush1.bf16.msra.mxu0 0
    %98 = vmatprep.subr.bf16.mxu0 0
    %99 = vmatpush1.bf16.msra.mxu0 0
    %100 = vmatprep.subr.bf16.mxu0 0
    %101 = vmatpush1.bf16.msra.mxu0 0
    %102 = vmatprep.subr.bf16.mxu0 0
    %103 = vmatpush1.bf16.msra.mxu0 0
    %104 = vmatprep.subr.bf16.mxu0 0
    %105 = vmatpush1.bf16.msra.mxu0 0
    %106 = vmatprep.subr.bf16.mxu0 0
    %107 = vmatpush1.bf16.msra.mxu0 0
    %108 = vmatprep.subr.bf16.mxu0 0
    %109 = vmatpush1.bf16.msra.mxu0 0
    %110 = vmatprep.subr.bf16.mxu0 0
    %111 = vmatpush1.bf16.msra.mxu0 0
    %112 = vmatprep.subr.bf16.mxu0 0
    %113 = vmatpush1.bf16.msra.mxu0 0
    %114 = vmatprep.subr.bf16.mxu0 0
    %115 = vmatpush1.bf16.msra.mxu0 0
    %116 = vmatprep.subr.bf16.mxu0 0
    %117 = vmatpush1.bf16.msra.mxu0 0
    %118 = vmatprep.mubr.bf16.mxu0 0
    %119 = vmatmul.mubr.bf16.gmra.mrb[0].mxu0 %v84
    %v120 = vpop.f32.mrb[0].mxu0
    %v121 = vadd.f32 %v69, %v120
    %v122 = vpop.f32.mrb[0].mxu0
    %v123 = vpop.f32.mrb[0].mxu0
    %v124 = vadd.f32 %v69, %v123
    %v125 = vpop.f32.mrb[0].mxu0
    %126 = vdwg.mxu0
    %v127 = vpack.c.bf16 %v124, %v121
    %v128 = vmax.bf16 %v127, 0
    %v129 = vld [vmem:[#allocation7] sm:$0xf]
    %v130 = vld [vmem:[#allocation7 + $0x4] sm:$0xf]
    %v131 = vld [vmem:[#allocation7 + $0x8] sm:$0xf]
    %v132 = vld [vmem:[#allocation7 + $0xc] sm:$0xf]
    %v133 = vld [vmem:[#allocation7 + $0x10] sm:$0xf]
    %v134 = vld [vmem:[#allocation7 + $0x14] sm:$0xf]
    %v135 = vld [vmem:[#allocation7 + $0x18] sm:$0xf]
    %v136 = vld [vmem:[#allocation7 + $0x1c] sm:$0xf]
    %v137 = vld [vmem:[#allocation7 + $0x20] sm:$0xf]
    %v138 = vld [vmem:[#allocation7 + $0x24] sm:$0xf]
    %v139 = vld [vmem:[#allocation7 + $0x28] sm:$0xf]
    %v140 = vld [vmem:[#allocation7 + $0x2c] sm:$0xf]
    %v141 = vld [vmem:[#allocation7 + $0x30] sm:$0xf]
    %v142 = vld [vmem:[#allocation7 + $0x34] sm:$0xf]
    %v143 = vld [vmem:[#allocation7 + $0x38] sm:$0xf]
    %v144 = vld [vmem:[#allocation7 + $0x3c] sm:$0xf]
    %s145 = scalar_lea.vmem %s3, 1
    %v146 = vld [vmem:[%s145] sm:$0x1]
    %v148 = vlaneseq
    %v149 = vshrl.u32 %v148, 7
    %v150 = vsub.s32 0, %v149
    %v151 = vrot.slane %v146, %v150
    %v169 = vunpack.c.l.b16 %v129
    %v170 = vunpack.c.l.b16 %v130
    %v171 = vunpack.c.l.b16 %v131
    %v172 = vunpack.c.l.b16 %v132
    %v173 = vunpack.c.l.b16 %v133
    %v174 = vunpack.c.l.b16 %v134
    %v175 = vunpack.c.l.b16 %v135
    %v176 = vunpack.c.l.b16 %v136
    %v177 = vunpack.c.l.b16 %v137
    %v178 = vunpack.c.l.b16 %v138
    %v179 = vunpack.c.l.b16 %v139
    %v180 = vunpack.c.l.b16 %v140
    %v181 = vunpack.c.l.b16 %v141
    %v182 = vunpack.c.l.b16 %v142
    %v183 = vunpack.c.l.b16 %v143
    %v184 = vunpack.c.l.b16 %v144
    %v185 = vpack.c.b16 %v170, %v169
    %v186 = vpack.c.b16 %v172, %v171
    %v187 = vpack.c.b16 %v174, %v173
    %v188 = vpack.c.b16 %v176, %v175
    %v189 = vpack.c.b16 %v178, %v177
    %v190 = vpack.c.b16 %v180, %v179
    %v191 = vpack.c.b16 %v182, %v181
    %v192 = vpack.c.b16 %v184, %v183
    %201 = vmatprep.subr.bf16.mxu0 0
    %202 = vmatpush1.bf16.msra.mxu0 %v185
    %203 = vmatprep.subr.bf16.mxu0 0
    %204 = vmatpush1.bf16.msra.mxu0 %v186
    %205 = vmatprep.subr.bf16.mxu0 0
    %206 = vmatpush1.bf16.msra.mxu0 %v187
    %207 = vmatprep.subr.bf16.mxu0 0
    %208 = vmatpush1.bf16.msra.mxu0 %v188
    %209 = vmatprep.subr.bf16.mxu0 0
    %210 = vmatpush1.bf16.msra.mxu0 %v189
    %211 = vmatprep.subr.bf16.mxu0 0
    %212 = vmatpush1.bf16.msra.mxu0 %v190
    %213 = vmatprep.subr.bf16.mxu0 0
    %214 = vmatpush1.bf16.msra.mxu0 %v191
    %215 = vmatprep.subr.bf16.mxu0 0
    %216 = vmatpush1.bf16.msra.mxu0 %v192
    %217 = vmatprep.subr.bf16.mxu0 0
    %218 = vmatpush1.bf16.msra.mxu0 0
    %219 = vmatprep.subr.bf16.mxu0 0
    %220 = vmatpush1.bf16.msra.mxu0 0
    %221 = vmatprep.subr.bf16.mxu0 0
    %222 = vmatpush1.bf16.msra.mxu0 0
    %223 = vmatprep.subr.bf16.mxu0 0
    %224 = vmatpush1.bf16.msra.mxu0 0
    %225 = vmatprep.subr.bf16.mxu0 0
    %226 = vmatpush1.bf16.msra.mxu0 0
    %227 = vmatprep.subr.bf16.mxu0 0
    %228 = vmatpush1.bf16.msra.mxu0 0
    %229 = vmatprep.subr.bf16.mxu0 0
    %230 = vmatpush1.bf16.msra.mxu0 0
    %231 = vmatprep.subr.bf16.mxu0 0
    %232 = vmatpush1.bf16.msra.mxu0 0
    %233 = vmatprep.mubr.bf16.mxu0 0
    %234 = vmatmul.mubr.bf16.gmra.mrb[0].mxu0 %v128
    %v235 = vpop.f32.mrb[0].mxu0
    %v236 = vadd.f32 %v151, %v235
    %v237 = vpop.f32.mrb[0].mxu0
    %v238 = vpop.f32.mrb[0].mxu0
    %v239 = vadd.f32 %v151, %v238
    %v240 = vpop.f32.mrb[0].mxu0
    %241 = vdwg.mxu0
    %v242 = vpack.c.bf16 %v239, %v236
    %v243 = vmax.bf16 %v242, 0
    %s244 = scalar_lea.vmem [#allocation7], 64
    %v245 = vld [vmem:[%s244] sm:$0xf]
    %v246 = vld [vmem:[%s244 + $0x4] sm:$0xf]
    %v247 = vld [vmem:[%s244 + $0x8] sm:$0xf]
    %v248 = vld [vmem:[%s244 + $0xc] sm:$0xf]
    %v249 = vld [vmem:[%s244 + $0x10] sm:$0xf]
    %v250 = vld [vmem:[%s244 + $0x14] sm:$0xf]
    %v251 = vld [vmem:[%s244 + $0x18] sm:$0xf]
    %v252 = vld [vmem:[%s244 + $0x1c] sm:$0xf]
    %v253 = vld [vmem:[%s244 + $0x20] sm:$0xf]
    %v254 = vld [vmem:[%s244 + $0x24] sm:$0xf]
    %v255 = vld [vmem:[%s244 + $0x28] sm:$0xf]
    %v256 = vld [vmem:[%s244 + $0x2c] sm:$0xf]
    %v257 = vld [vmem:[%s244 + $0x30] sm:$0xf]
    %v258 = vld [vmem:[%s244 + $0x34] sm:$0xf]
    %v259 = vld [vmem:[%s244 + $0x38] sm:$0xf]
    %v260 = vld [vmem:[%s244 + $0x3c] sm:$0xf]
    %s261 = scalar_lea.vmem %s3, 2
    %v262 = vld [vmem:[%s261] sm:$0x1]
    %v264 = vlaneseq
    %v265 = vshrl.u32 %v264, 7
    %v266 = vsub.s32 0, %v265
    %v267 = vrot.slane %v262, %v266
    %v285 = vunpack.c.l.b16 %v245
    %v286 = vunpack.c.l.b16 %v246
    %v287 = vunpack.c.l.b16 %v247
    %v288 = vunpack.c.l.b16 %v248
    %v289 = vunpack.c.l.b16 %v249
    %v290 = vunpack.c.l.b16 %v250
    %v291 = vunpack.c.l.b16 %v251
    %v292 = vunpack.c.l.b16 %v252
    %v293 = vunpack.c.l.b16 %v253
    %v294 = vunpack.c.l.b16 %v254
    %v295 = vunpack.c.l.b16 %v255
    %v296 = vunpack.c.l.b16 %v256
    %v297 = vunpack.c.l.b16 %v257
    %v298 = vunpack.c.l.b16 %v258
    %v299 = vunpack.c.l.b16 %v259
    %v300 = vunpack.c.l.b16 %v260
    %v301 = vpack.c.b16 %v286, %v285
    %v302 = vpack.c.b16 %v288, %v287
    %v303 = vpack.c.b16 %v290, %v289
    %v304 = vpack.c.b16 %v292, %v291
    %v305 = vpack.c.b16 %v294, %v293
    %v306 = vpack.c.b16 %v296, %v295
    %v307 = vpack.c.b16 %v298, %v297
    %v308 = vpack.c.b16 %v300, %v299
    %317 = vmatprep.subr.bf16.mxu0 0
    %318 = vmatpush1.bf16.msra.mxu0 %v301
    %319 = vmatprep.subr.bf16.mxu0 0
    %320 = vmatpush1.bf16.msra.mxu0 %v302
    %321 = vmatprep.subr.bf16.mxu0 0
    %322 = vmatpush1.bf16.msra.mxu0 %v303
    %323 = vmatprep.subr.bf16.mxu0 0
    %324 = vmatpush1.bf16.msra.mxu0 %v304
    %325 = vmatprep.subr.bf16.mxu0 0
    %326 = vmatpush1.bf16.msra.mxu0 %v305
    %327 = vmatprep.subr.bf16.mxu0 0
    %328 = vmatpush1.bf16.msra.mxu0 %v306
    %329 = vmatprep.subr.bf16.mxu0 0
    %330 = vmatpush1.bf16.msra.mxu0 %v307
    %331 = vmatprep.subr.bf16.mxu0 0
    %332 = vmatpush1.bf16.msra.mxu0 %v308
    %333 = vmatprep.subr.bf16.mxu0 0
    %334 = vmatpush1.bf16.msra.mxu0 0
    %335 = vmatprep.subr.bf16.mxu0 0
    %336 = vmatpush1.bf16.msra.mxu0 0
    %337 = vmatprep.subr.bf16.mxu0 0
    %338 = vmatpush1.bf16.msra.mxu0 0
    %339 = vmatprep.subr.bf16.mxu0 0
    %340 = vmatpush1.bf16.msra.mxu0 0
    %341 = vmatprep.subr.bf16.mxu0 0
    %342 = vmatpush1.bf16.msra.mxu0 0
    %343 = vmatprep.subr.bf16.mxu0 0
    %344 = vmatpush1.bf16.msra.mxu0 0
    %345 = vmatprep.subr.bf16.mxu0 0
    %346 = vmatpush1.bf16.msra.mxu0 0
    %347 = vmatprep.subr.bf16.mxu0 0
    %348 = vmatpush1.bf16.msra.mxu0 0
    %349 = vmatprep.mubr.bf16.mxu0 0
    %350 = vmatmul.mubr.bf16.gmra.mrb[0].mxu0 %v243
    %v351 = vpop.f32.mrb[0].mxu0
    %v352 = vadd.f32 %v267, %v351
    %v353 = vpop.f32.mrb[0].mxu0
    %v354 = vpop.f32.mrb[0].mxu0
    %v355 = vadd.f32 %v267, %v354
    %v356 = vpop.f32.mrb[0].mxu0
    %357 = vdwg.mxu0
    %v358 = vsub.f32 0.0, %v352
    %v359 = vsub.f32 0.0, %v355
    %v360 = vmul.f32 %v358, 1.442695
    %v361 = vpow.pop %v360
    %v362 = vmul.f32 %v359, 1.442695
    %v363 = vpow.pop %v362
    %v364 = vadd.f32 %v361, 1.0
    %v365 = vadd.f32 %v363, 1.0
    %v366 = vrcp.pop %v364
    %v367 = vrcp.pop %v365
    %v368 = vpack.c.bf16 %v367, %v366
    %s369 = scalar_lea.vmem [#allocation7], 128
    %v370 = vld [vmem:[%s369] sm:$0xf]
    %v371 = vld [vmem:[%s369 + $0x4] sm:$0xf]
    %v372 = vld [vmem:[%s369 + $0x8] sm:$0xf]
    %v373 = vld [vmem:[%s369 + $0xc] sm:$0xf]
    %v374 = vld [vmem:[%s369 + $0x10] sm:$0xf]
    %v375 = vld [vmem:[%s369 + $0x14] sm:$0xf]
    %v376 = vld [vmem:[%s369 + $0x18] sm:$0xf]
    %v377 = vld [vmem:[%s369 + $0x1c] sm:$0xf]
    %v378 = vld [vmem:[%s369 + $0x20] sm:$0xf]
    %v379 = vld [vmem:[%s369 + $0x24] sm:$0xf]
    %v380 = vld [vmem:[%s369 + $0x28] sm:$0xf]
    %v381 = vld [vmem:[%s369 + $0x2c] sm:$0xf]
    %v382 = vld [vmem:[%s369 + $0x30] sm:$0xf]
    %v383 = vld [vmem:[%s369 + $0x34] sm:$0xf]
    %v384 = vld [vmem:[%s369 + $0x38] sm:$0xf]
    %v385 = vld [vmem:[%s369 + $0x3c] sm:$0xf]
    %s386 = scalar_lea.vmem %s3, 3
    %v387 = vld [vmem:[%s386] sm:$0x1]
    %v389 = vlaneseq
    %v390 = vshrl.u32 %v389, 7
    %v391 = vsub.s32 0, %v390
    %v392 = vrot.slane %v387, %v391
    %v410 = vunpack.c.l.b16 %v370
    %v411 = vunpack.c.l.b16 %v371
    %v412 = vunpack.c.l.b16 %v372
    %v413 = vunpack.c.l.b16 %v373
    %v414 = vunpack.c.l.b16 %v374
    %v415 = vunpack.c.l.b16 %v375
    %v416 = vunpack.c.l.b16 %v376
    %v417 = vunpack.c.l.b16 %v377
    %v418 = vunpack.c.l.b16 %v378
    %v419 = vunpack.c.l.b16 %v379
    %v420 = vunpack.c.l.b16 %v380
    %v421 = vunpack.c.l.b16 %v381
    %v422 = vunpack.c.l.b16 %v382
    %v423 = vunpack.c.l.b16 %v383
    %v424 = vunpack.c.l.b16 %v384
    %v425 = vunpack.c.l.b16 %v385
    %v426 = vpack.c.b16 %v411, %v410
    %v427 = vpack.c.b16 %v413, %v412
    %v428 = vpack.c.b16 %v415, %v414
    %v429 = vpack.c.b16 %v417, %v416
    %v430 = vpack.c.b16 %v419, %v418
    %v431 = vpack.c.b16 %v421, %v420
    %v432 = vpack.c.b16 %v423, %v422
    %v433 = vpack.c.b16 %v425, %v424
    %442 = vmatprep.subr.bf16.mxu0 0
    %443 = vmatpush1.bf16.msra.mxu0 %v426
    %444 = vmatprep.subr.bf16.mxu0 0
    %445 = vmatpush1.bf16.msra.mxu0 %v427
    %446 = vmatprep.subr.bf16.mxu0 0
    %447 = vmatpush1.bf16.msra.mxu0 %v428
    %448 = vmatprep.subr.bf16.mxu0 0
    %449 = vmatpush1.bf16.msra.mxu0 %v429
    %450 = vmatprep.subr.bf16.mxu0 0
    %451 = vmatpush1.bf16.msra.mxu0 %v430
    %452 = vmatprep.subr.bf16.mxu0 0
    %453 = vmatpush1.bf16.msra.mxu0 %v431
    %454 = vmatprep.subr.bf16.mxu0 0
    %455 = vmatpush1.bf16.msra.mxu0 %v432
    %456 = vmatprep.subr.bf16.mxu0 0
    %457 = vmatpush1.bf16.msra.mxu0 %v433
    %458 = vmatprep.subr.bf16.mxu0 0
    %459 = vmatpush1.bf16.msra.mxu0 0
    %460 = vmatprep.subr.bf16.mxu0 0
    %461 = vmatpush1.bf16.msra.mxu0 0
    %462 = vmatprep.subr.bf16.mxu0 0
    %463 = vmatpush1.bf16.msra.mxu0 0
    %464 = vmatprep.subr.bf16.mxu0 0
    %465 = vmatpush1.bf16.msra.mxu0 0
    %466 = vmatprep.subr.bf16.mxu0 0
    %467 = vmatpush1.bf16.msra.mxu0 0
    %468 = vmatprep.subr.bf16.mxu0 0
    %469 = vmatpush1.bf16.msra.mxu0 0
    %470 = vmatprep.subr.bf16.mxu0 0
    %471 = vmatpush1.bf16.msra.mxu0 0
    %472 = vmatprep.subr.bf16.mxu0 0
    %473 = vmatpush1.bf16.msra.mxu0 0
    %474 = vmatprep.mubr.bf16.mxu0 0
    %475 = vmatmul.mubr.bf16.gmra.mrb[0].mxu0 %v368
    %v476 = vpop.f32.mrb[0].mxu0
    %v477 = vadd.f32 %v392, %v476
    %v478 = vpop.f32.mrb[0].mxu0
    %v479 = vpop.f32.mrb[0].mxu0
    %v480 = vadd.f32 %v392, %v479
    %v481 = vpop.f32.mrb[0].mxu0
    %482 = vdwg.mxu0
    %v483 = vpack.c.bf16 %v480, %v477
    %v484 = vmax.bf16 %v483, 0
    %s485 = scalar_lea.vmem [#allocation7], 192
    %v486 = vld [vmem:[%s485] sm:$0xf]
    %v487 = vld [vmem:[%s485 + $0x4] sm:$0xf]
    %v488 = vld [vmem:[%s485 + $0x8] sm:$0xf]
    %v489 = vld [vmem:[%s485 + $0xc] sm:$0xf]
    %v490 = vld [vmem:[%s485 + $0x10] sm:$0xf]
    %v491 = vld [vmem:[%s485 + $0x14] sm:$0xf]
    %v492 = vld [vmem:[%s485 + $0x18] sm:$0xf]
    %v493 = vld [vmem:[%s485 + $0x1c] sm:$0xf]
    %v494 = vld [vmem:[%s485 + $0x20] sm:$0xf]
    %v495 = vld [vmem:[%s485 + $0x24] sm:$0xf]
    %v496 = vld [vmem:[%s485 + $0x28] sm:$0xf]
    %v497 = vld [vmem:[%s485 + $0x2c] sm:$0xf]
    %v498 = vld [vmem:[%s485 + $0x30] sm:$0xf]
    %v499 = vld [vmem:[%s485 + $0x34] sm:$0xf]
    %v500 = vld [vmem:[%s485 + $0x38] sm:$0xf]
    %v501 = vld [vmem:[%s485 + $0x3c] sm:$0xf]
    %s502 = scalar_lea.vmem %s3, 4
    %v503 = vld [vmem:[%s502] sm:$0x1]
    %v505 = vlaneseq
    %v506 = vshrl.u32 %v505, 7
    %v507 = vsub.s32 0, %v506
    %v508 = vrot.slane %v503, %v507
    %v526 = vunpack.c.l.b16 %v486
    %v527 = vunpack.c.l.b16 %v487
    %v528 = vunpack.c.l.b16 %v488
    %v529 = vunpack.c.l.b16 %v489
    %v530 = vunpack.c.l.b16 %v490
    %v531 = vunpack.c.l.b16 %v491
    %v532 = vunpack.c.l.b16 %v492
    %v533 = vunpack.c.l.b16 %v493
    %v534 = vunpack.c.l.b16 %v494
    %v535 = vunpack.c.l.b16 %v495
    %v536 = vunpack.c.l.b16 %v496
    %v537 = vunpack.c.l.b16 %v497
    %v538 = vunpack.c.l.b16 %v498
    %v539 = vunpack.c.l.b16 %v499
    %v540 = vunpack.c.l.b16 %v500
    %v541 = vunpack.c.l.b16 %v501
    %v542 = vpack.c.b16 %v527, %v526
    %v543 = vpack.c.b16 %v529, %v528
    %v544 = vpack.c.b16 %v531, %v530
    %v545 = vpack.c.b16 %v533, %v532
    %v546 = vpack.c.b16 %v535, %v534
    %v547 = vpack.c.b16 %v537, %v536
    %v548 = vpack.c.b16 %v539, %v538
    %v549 = vpack.c.b16 %v541, %v540
    %558 = vmatprep.subr.bf16.mxu0 0
    %559 = vmatpush1.bf16.msra.mxu0 %v542
    %560 = vmatprep.subr.bf16.mxu0 0
    %561 = vmatpush1.bf16.msra.mxu0 %v543
    %562 = vmatprep.subr.bf16.mxu0 0
    %563 = vmatpush1.bf16.msra.mxu0 %v544
    %564 = vmatprep.subr.bf16.mxu0 0
    %565 = vmatpush1.bf16.msra.mxu0 %v545
    %566 = vmatprep.subr.bf16.mxu0 0
    %567 = vmatpush1.bf16.msra.mxu0 %v546
    %568 = vmatprep.subr.bf16.mxu0 0
    %569 = vmatpush1.bf16.msra.mxu0 %v547
    %570 = vmatprep.subr.bf16.mxu0 0
    %571 = vmatpush1.bf16.msra.mxu0 %v548
    %572 = vmatprep.subr.bf16.mxu0 0
    %573 = vmatpush1.bf16.msra.mxu0 %v549
    %574 = vmatprep.subr.bf16.mxu0 0
    %575 = vmatpush1.bf16.msra.mxu0 0
    %576 = vmatprep.subr.bf16.mxu0 0
    %577 = vmatpush1.bf16.msra.mxu0 0
    %578 = vmatprep.subr.bf16.mxu0 0
    %579 = vmatpush1.bf16.msra.mxu0 0
    %580 = vmatprep.subr.bf16.mxu0 0
    %581 = vmatpush1.bf16.msra.mxu0 0
    %582 = vmatprep.subr.bf16.mxu0 0
    %583 = vmatpush1.bf16.msra.mxu0 0
    %584 = vmatprep.subr.bf16.mxu0 0
    %585 = vmatpush1.bf16.msra.mxu0 0
    %586 = vmatprep.subr.bf16.mxu0 0
    %587 = vmatpush1.bf16.msra.mxu0 0
    %588 = vmatprep.subr.bf16.mxu0 0
    %589 = vmatpush1.bf16.msra.mxu0 0
    %590 = vmatprep.mubr.bf16.mxu0 0
    %591 = vmatmul.mubr.bf16.gmra.mrb[0].mxu0 %v484
    %v592 = vpop.f32.mrb[0].mxu0
    %v593 = vadd.f32 %v508, %v592
    %v594 = vpop.f32.mrb[0].mxu0
    %v595 = vpop.f32.mrb[0].mxu0
    %v596 = vadd.f32 %v508, %v595
    %v597 = vpop.f32.mrb[0].mxu0
    %598 = vdwg.mxu0
    %v599 = vpack.c.bf16 %v596, %v593
    %v600 = vmax.bf16 %v599, 0
    %s601 = scalar_lea.vmem [#allocation7], 256
    %v602 = vld [vmem:[%s601] sm:$0xf]
    %v603 = vld [vmem:[%s601 + $0x4] sm:$0xf]
    %v604 = vld [vmem:[%s601 + $0x8] sm:$0xf]
    %v605 = vld [vmem:[%s601 + $0xc] sm:$0xf]
    %v606 = vld [vmem:[%s601 + $0x10] sm:$0xf]
    %v607 = vld [vmem:[%s601 + $0x14] sm:$0xf]
    %v608 = vld [vmem:[%s601 + $0x18] sm:$0xf]
    %v609 = vld [vmem:[%s601 + $0x1c] sm:$0xf]
    %v610 = vld [vmem:[%s601 + $0x20] sm:$0xf]
    %v611 = vld [vmem:[%s601 + $0x24] sm:$0xf]
    %v612 = vld [vmem:[%s601 + $0x28] sm:$0xf]
    %v613 = vld [vmem:[%s601 + $0x2c] sm:$0xf]
    %v614 = vld [vmem:[%s601 + $0x30] sm:$0xf]
    %v615 = vld [vmem:[%s601 + $0x34] sm:$0xf]
    %v616 = vld [vmem:[%s601 + $0x38] sm:$0xf]
    %v617 = vld [vmem:[%s601 + $0x3c] sm:$0xf]
    %s618 = scalar_lea.vmem %s3, 5
    %v619 = vld [vmem:[%s618] sm:$0x1]
    %v621 = vlaneseq
    %v622 = vshrl.u32 %v621, 7
    %v623 = vsub.s32 0, %v622
    %v624 = vrot.slane %v619, %v623
    %v642 = vunpack.c.l.b16 %v602
    %v643 = vunpack.c.l.b16 %v603
    %v644 = vunpack.c.l.b16 %v604
    %v645 = vunpack.c.l.b16 %v605
    %v646 = vunpack.c.l.b16 %v606
    %v647 = vunpack.c.l.b16 %v607
    %v648 = vunpack.c.l.b16 %v608
    %v649 = vunpack.c.l.b16 %v609
    %v650 = vunpack.c.l.b16 %v610
    %v651 = vunpack.c.l.b16 %v611
    %v652 = vunpack.c.l.b16 %v612
    %v653 = vunpack.c.l.b16 %v613
    %v654 = vunpack.c.l.b16 %v614
    %v655 = vunpack.c.l.b16 %v615
    %v656 = vunpack.c.l.b16 %v616
    %v657 = vunpack.c.l.b16 %v617
    %v658 = vpack.c.b16 %v643, %v642
    %v659 = vpack.c.b16 %v645, %v644
    %v660 = vpack.c.b16 %v647, %v646
    %v661 = vpack.c.b16 %v649, %v648
    %v662 = vpack.c.b16 %v651, %v650
    %v663 = vpack.c.b16 %v653, %v652
    %v664 = vpack.c.b16 %v655, %v654
    %v665 = vpack.c.b16 %v657, %v656
    %674 = vmatprep.subr.bf16.mxu0 0
    %675 = vmatpush1.bf16.msra.mxu0 %v658
    %676 = vmatprep.subr.bf16.mxu0 0
    %677 = vmatpush1.bf16.msra.mxu0 %v659
    %678 = vmatprep.subr.bf16.mxu0 0
    %679 = vmatpush1.bf16.msra.mxu0 %v660
    %680 = vmatprep.subr.bf16.mxu0 0
    %681 = vmatpush1.bf16.msra.mxu0 %v661
    %682 = vmatprep.subr.bf16.mxu0 0
    %683 = vmatpush1.bf16.msra.mxu0 %v662
    %684 = vmatprep.subr.bf16.mxu0 0
    %685 = vmatpush1.bf16.msra.mxu0 %v663
    %686 = vmatprep.subr.bf16.mxu0 0
    %687 = vmatpush1.bf16.msra.mxu0 %v664
    %688 = vmatprep.subr.bf16.mxu0 0
    %689 = vmatpush1.bf16.msra.mxu0 %v665
    %690 = vmatprep.subr.bf16.mxu0 0
    %691 = vmatpush1.bf16.msra.mxu0 0
    %692 = vmatprep.subr.bf16.mxu0 0
    %693 = vmatpush1.bf16.msra.mxu0 0
    %694 = vmatprep.subr.bf16.mxu0 0
    %695 = vmatpush1.bf16.msra.mxu0 0
    %696 = vmatprep.subr.bf16.mxu0 0
    %697 = vmatpush1.bf16.msra.mxu0 0
    %698 = vmatprep.subr.bf16.mxu0 0
    %699 = vmatpush1.bf16.msra.mxu0 0
    %700 = vmatprep.subr.bf16.mxu0 0
    %701 = vmatpush1.bf16.msra.mxu0 0
    %702 = vmatprep.subr.bf16.mxu0 0
    %703 = vmatpush1.bf16.msra.mxu0 0
    %704 = vmatprep.subr.bf16.mxu0 0
    %705 = vmatpush1.bf16.msra.mxu0 0
    %706 = vmatprep.mubr.bf16.mxu0 0
    %707 = vmatmul.mubr.bf16.gmra.mrb[0].mxu0 %v600
    %v708 = vpop.f32.mrb[0].mxu0
    %v709 = vadd.f32 %v624, %v708
    %v710 = vpop.f32.mrb[0].mxu0
    %v711 = vpop.f32.mrb[0].mxu0
    %v712 = vadd.f32 %v624, %v711
    %v713 = vpop.f32.mrb[0].mxu0
    %714 = vdwg.mxu0
    %v715 = vsub.f32 0.0, %v709
    %v716 = vsub.f32 0.0, %v712
    %v717 = vmul.f32 %v715, 1.442695
    %v718 = vpow.pop %v717
    %v719 = vmul.f32 %v716, 1.442695
    %v720 = vpow.pop %v719
    %v721 = vadd.f32 %v718, 1.0
    %v722 = vadd.f32 %v720, 1.0
    %v723 = vrcp.pop %v721
    %v724 = vrcp.pop %v722
    %v725 = vpack.c.bf16 %v724, %v723
    %v727 = vunpack.c.l.b16 %v725
    %v728 = vunpack.c.h.b16 %v725
    %v729 = vpack.c.b16 %v727, %v727
    %v730 = vpack.c.b16 %v728, %v728
    %733 = vst [vmem:[#allocation8] sm:$0xf] %v729
    %734 = vst [vmem:[#allocation8 + $0x4] sm:$0xf] %v730
    // Predicated region
    $region30: #{tpu_custom_call.1} parent=1 // pred_check
      _
    $region31: #{tpu_custom_call.1} parent=1 // pred_check_branch
      %736 = sbr.rel (0) target = $region33
    $region32: #{tpu_custom_call.1} parent=1 // pred_region
      %s738 = ssub.s32 128, 128
      %739 = vsyncadd [#allocation4], %s738
      %s740 = sshll.u32 [#allocation8], 4
      %s741 = int_to_ptr.vmem [resolvable:$true] %s740
      %746 = dma.vmem_to_hbm [thread:$0]  %s741, 128, %s4, [#allocation4], 64, 64, 4
    $region33: #{tpu_custom_call.1} parent=1 // pred_fallthru
      _
    // Predicated region
    $region34: #{tpu_custom_call.1} parent=1 // pred_check
      _
    $region35: #{tpu_custom_call.1} parent=1 // pred_check_branch
      %748 = sbr.rel (0) target = $region37
    $region36: #{tpu_custom_call.1} parent=1 // pred_region
      %749 = dma.done [#allocation4], 128
    $region37: #{tpu_custom_call.1} parent=1 // pred_fallthru
      _
    %750 = vsyncpa [#allocation3], 1
    %751 = vsyncpa [#allocation6], 1
    %752 = vsyncpa [#allocation4], 1

</llo_original>
